<compile_context>
chip_gen: v7x
topology: tpu7x:2x2x1
jax: 0.10.0
libtpu: 0.0.40
codegen_flags: <defaults>
</compile_context>

<pallas_src>
import functools

import jax
import jax.numpy as jnp
from jax import lax
from jax.experimental import pallas as pl
from jax.experimental.pallas import tpu as pltpu

BN_EPS = 1e-5


def _round_up(x, m):
    return (x + m - 1) // m * m


# --------------------------------------------------------------------------
# Stage 1: h = x @ w1 (bf16 MXU, f32 acc) + per-tile BN partial statistics.
# --------------------------------------------------------------------------
def _stage1_kernel(x_ref, w1_ref, h_ref, stats_ref):
    # x: (TN, Din) f32   w1: (Din, H) bf16
    x = x_ref[...].astype(jnp.bfloat16)
    h = jnp.dot(x, w1_ref[...], preferred_element_type=jnp.float32)  # (TN, H) f32
    h_ref[...] = h
    # Single-pass partial stats for this batch tile; reduced over tiles in JAX.
    stats_ref[0, 0:1, :] = jnp.sum(h, axis=0, keepdims=True)        # sum
    stats_ref[0, 1:2, :] = jnp.sum(h * h, axis=0, keepdims=True)    # sum of squares


# --------------------------------------------------------------------------
# Stage 2: BN folded into scale/shift + ReLU + h @ w2 + b2 (bf16 MXU, f32 acc).
# --------------------------------------------------------------------------
def _stage2_kernel(h_ref, stats_ref, gamma_ref, beta_ref, w2_ref, b2_ref, o_ref,
                   *, n_real):
    inv_n = 1.0 / float(n_real)
    mean = stats_ref[0:1, :] * inv_n                       # (1, H)
    var = stats_ref[1:2, :] * inv_n - mean * mean          # biased (train-mode) var
    scale = gamma_ref[...] * lax.rsqrt(var + BN_EPS)       # (1, H)
    shift = beta_ref[...] - mean * scale                   # (1, H)

    y = jnp.maximum(h_ref[...] * scale + shift, 0.0).astype(jnp.bfloat16)
    out = jnp.dot(y, w2_ref[...], preferred_element_type=jnp.float32) + b2_ref[...]
    o_ref[...] = out.astype(o_ref.dtype)


def prediction_mlp_simsiam(x, params, *, block_n=None):
    """x: (N, input_dim) float32.  params: dict of weights (see init_params)."""
    n, din = x.shape
    h_dim = params["w1"].shape[1]
    dout = params["w2"].shape[1]

    if block_n is None:
        # Biggest batch tile that keeps double-buffered tiles + resident weights
        # comfortably under the 32 MiB scoped-VMEM budget (safe on v5e..v7x).
        block_n = min(256, _round_up(n, 8))
    n_pad = _round_up(n, block_n)
    n_tiles = n_pad // block_n

    x = x.astype(jnp.float32)
    if n_pad != n:
        # Zero rows: h = 0 @ w1 = 0 exactly (no pre-BN bias), so padded rows
        # contribute nothing to the BN sums; their outputs are sliced off below.
        x = jnp.pad(x, ((0, n_pad - n), (0, 0)))

    w1 = params["w1"].astype(jnp.bfloat16)
    w2 = params["w2"].astype(jnp.bfloat16)
    gamma = params["gamma"].astype(jnp.float32)
    beta = params["beta"].astype(jnp.float32)
    b2 = params["b2"].astype(jnp.float32)
    # NOTE: params["b1"] is intentionally NOT used: a per-feature bias before
    # BatchNorm is cancelled by the mean subtraction (output is identical).

    cparams = pltpu.CompilerParams(
        dimension_semantics=("parallel",),
        vmem_limit_bytes=32 * 1024 * 1024,
    )

    # ---- stage 1: linear-1 + streaming BN partial stats -------------------
    flops1 = 2 * n_pad * din * h_dim
    bytes1 = (x.size * 4 + w1.size * 2
              + n_pad * h_dim * 4 + n_tiles * 2 * h_dim * 4)
    h, part_stats = pl.pallas_call(
        _stage1_kernel,
        grid=(n_tiles,),
        in_specs=[
            pl.BlockSpec((block_n, din), lambda i: (i, 0)),   # streamed x tile
            pl.BlockSpec((din, h_dim), lambda i: (0, 0)),     # resident w1
        ],
        out_specs=[
            pl.BlockSpec((block_n, h_dim), lambda i: (i, 0)),
            pl.BlockSpec((1, 2, h_dim), lambda i: (i, 0, 0)),
        ],
        out_shape=[
            jax.ShapeDtypeStruct((n_pad, h_dim), jnp.float32),
            jax.ShapeDtypeStruct((n_tiles, 2, h_dim), jnp.float32),
        ],
        compiler_params=cparams,
        cost_estimate=pl.CostEstimate(
            flops=flops1, transcendentals=0, bytes_accessed=bytes1),
    )(x, w1)

    # Tiny (n_tiles, 2, H) -> (2, H) combine of the per-tile partial sums.
    stats = jnp.sum(part_stats, axis=0)

    # ---- stage 2: BN scale/shift + ReLU + linear-2 -------------------------
    flops2 = 2 * n_pad * h_dim * dout + 4 * n_pad * h_dim
    bytes2 = (n_pad * h_dim * 4 + 2 * h_dim * 4 + 2 * h_dim * 4
              + w2.size * 2 + dout * 4 + n_pad * dout * 4)
    out = pl.pallas_call(
        functools.partial(_stage2_kernel, n_real=n),
        grid=(n_tiles,),
        in_specs=[
            pl.BlockSpec((block_n, h_dim), lambda i: (i, 0)),  # streamed h tile
            pl.BlockSpec((2, h_dim), lambda i: (0, 0)),        # resident stats
            pl.BlockSpec((1, h_dim), lambda i: (0, 0)),        # gamma
            pl.BlockSpec((1, h_dim), lambda i: (0, 0)),        # beta
            pl.BlockSpec((h_dim, dout), lambda i: (0, 0)),     # resident w2
            pl.BlockSpec((1, dout), lambda i: (0, 0)),         # b2
        ],
        out_specs=pl.BlockSpec((block_n, dout), lambda i: (i, 0)),
        out_shape=jax.ShapeDtypeStruct((n_pad, dout), jnp.float32),
        compiler_params=cparams,
        cost_estimate=pl.CostEstimate(
            flops=flops2, transcendentals=n_tiles * h_dim, bytes_accessed=bytes2),
    )(h, stats, gamma, beta, w2, b2)

    return out[:n].astype(x.dtype)


def init_params(key, input_dim, hidden_dim, output_dim):
    """Deterministic synthetic init mirroring nn.Linear / nn.BatchNorm1d shapes."""
    k1, k2, k3, k4 = jax.random.split(key, 4)
    s1 = 1.0 / jnp.sqrt(jnp.float32(input_dim))
    s2 = 1.0 / jnp.sqrt(jnp.float32(hidden_dim))
    # Linear weights stored pre-transposed: (in_features, out_features).
    w1 = jax.random.uniform(k1, (input_dim, hidden_dim), jnp.float32, -s1, s1)
    b1 = jax.random.uniform(k2, (1, hidden_dim), jnp.float32, -s1, s1)
    w2 = jax.random.uniform(k3, (hidden_dim, output_dim), jnp.float32, -s2, s2)
    b2 = jax.random.uniform(k4, (1, output_dim), jnp.float32, -s2, s2)
    # BatchNorm1d affine params default to weight=1, bias=0.
    gamma = jnp.ones((1, hidden_dim), jnp.float32)
    beta = jnp.zeros((1, hidden_dim), jnp.float32)
    return {"w1": w1, "b1": b1, "gamma": gamma, "beta": beta,
            "w2": w2, "b2": b2}


def reference_forward(x, p):
    """Pure-JAX f32 reference matching the PyTorch module (b1 included: it
    cancels under the BN mean subtraction, so outputs match the kernel)."""
    h = x @ p["w1"] + p["b1"]
    mean = jnp.mean(h, axis=0, keepdims=True)
    var = jnp.mean((h - mean) ** 2, axis=0, keepdims=True)
    h = (h - mean) / jnp.sqrt(var + BN_EPS)
    h = h * p["gamma"] + p["beta"]
    h = jnp.maximum(h, 0.0)
    return h @ p["w2"] + p["b2"]


if __name__ == "__main__":
    # Small, lane-friendly shapes consistent with the module
    # (defaults 2048 -> 512 -> 2048, scaled down).
    batch, input_dim, hidden_dim, output_dim = 16, 256, 128, 384

    key = jax.random.PRNGKey(0)
    kx, kp = jax.random.split(key)
    x = jax.random.normal(kx, (batch, input_dim), jnp.float32)
    params = init_params(kp, input_dim, hidden_dim, output_dim)

    # block_n=8 -> grid=(2,): exercises the batch tiling + streamed BN stats.
    out = prediction_mlp_simsiam(x, params, block_n=8)
    out = jax.block_until_ready(out)

    ref = reference_forward(x, params)
    assert out.shape == (batch, output_dim)
    # Tolerance loosened vs the f32 reference because both matmuls run on the
    # MXU in bf16 (f32 accumulation); BN statistics/normalization stay in f32.
    assert jnp.allclose(out, ref, atol=5e-2, rtol=5e-2), float(
        jnp.max(jnp.abs(out - ref)))
    print("KERNEL_OK")
</pallas_src>

<mosaic_0001>
module attributes {stable_mosaic.version = 11 : i64} {
  func.func @_stage1_kernel(%arg0: i32, %arg1: memref<8x256xf32, #tpu.memory_space<vmem>>, %arg2: memref<256x128xbf16, #tpu.memory_space<vmem>>, %arg3: memref<8x128xf32, #tpu.memory_space<vmem>>, %arg4: memref<1x2x128xf32, #tpu.memory_space<vmem>>) attributes {dimension_semantics = [#tpu.dimension_semantics<parallel>], iteration_bounds = array<i64: 2>, scalar_prefetch = 0 : i64, scratch_operands = 0 : i64, tpu.core_type = #tpu.core_type<tc>, window_params = [{transform_indices = @transform_0, window_bounds = array<i64: 8, 256>}, {pipeline_mode = #tpu.pipeline_mode<synchronous>, transform_indices = @transform_1, window_bounds = array<i64: 256, 128>}, {transform_indices = @transform_2, window_bounds = array<i64: 8, 128>}, {transform_indices = @transform_3, window_bounds = array<i64: 1, 2, 128>}]} {
    %c0 = arith.constant 0 : index
    %c0_0 = arith.constant 0 : index
    %0 = vector.load %arg1[%c0, %c0_0] : memref<8x256xf32, #tpu.memory_space<vmem>>, vector<8x256xf32>
    %1 = arith.truncf %0 : vector<8x256xf32> to vector<8x256xbf16>
    %c0_1 = arith.constant 0 : index
    %c0_2 = arith.constant 0 : index
    %2 = vector.load %arg2[%c0_1, %c0_2] : memref<256x128xbf16, #tpu.memory_space<vmem>>, vector<256x128xbf16>
    %cst = arith.constant dense<0.000000e+00> : vector<8x128xf32>
    %3 = tpu.matmul %1, %2, %cst {dimension_numbers = #tpu.dot_dimension_numbers<[1], [0], [0], [1], [0, 0, 1, 1], [], []>} : vector<8x256xbf16>, vector<256x128xbf16>, vector<8x128xf32> -> vector<8x128xf32>
    %c0_3 = arith.constant 0 : index
    %c0_4 = arith.constant 0 : index
    %4 = vector.load %arg3[%c0_3, %c0_4] : memref<8x128xf32, #tpu.memory_space<vmem>>, vector<8x128xf32>
    tpu.vector_store %arg3[%c0_3, %c0_4], %3 {strides = array<i32>} : memref<8x128xf32, #tpu.memory_space<vmem>>, vector<8x128xf32>,
    %cst_5 = arith.constant dense<0.000000e+00> : vector<128xf32>
    %5 = vector.multi_reduction <add>, %3, %cst_5 [0] : vector<8x128xf32> to vector<128xf32>
    %6 = vector.shape_cast %5 : vector<128xf32> to vector<1x128xf32>
    %c0_6 = arith.constant 0 : index
    %c0_7 = arith.constant 0 : index
    %c0_8 = arith.constant 0 : index
    %7 = vector.load %arg4[%c0_6, %c0_7, %c0_8] : memref<1x2x128xf32, #tpu.memory_space<vmem>>, vector<1x1x128xf32>
    %8 = vector.shape_cast %7 : vector<1x1x128xf32> to vector<1x128xf32>
    %9 = vector.shape_cast %6 : vector<1x128xf32> to vector<1x1x128xf32>
    tpu.vector_store %arg4[%c0_6, %c0_7, %c0_8], %9 {strides = array<i32>} : memref<1x2x128xf32, #tpu.memory_space<vmem>>, vector<1x1x128xf32>,
    %10 = arith.mulf %3, %3 : vector<8x128xf32>
    %cst_9 = arith.constant dense<0.000000e+00> : vector<128xf32>
    %11 = vector.multi_reduction <add>, %10, %cst_9 [0] : vector<8x128xf32> to vector<128xf32>
    %12 = vector.shape_cast %11 : vector<128xf32> to vector<1x128xf32>
    %c0_10 = arith.constant 0 : index
    %c1 = arith.constant 1 : index
    %c0_11 = arith.constant 0 : index
    %13 = vector.load %arg4[%c0_10, %c1, %c0_11] : memref<1x2x128xf32, #tpu.memory_space<vmem>>, vector<1x1x128xf32>
    %14 = vector.shape_cast %13 : vector<1x1x128xf32> to vector<1x128xf32>
    %15 = vector.shape_cast %12 : vector<1x128xf32> to vector<1x1x128xf32>
    tpu.vector_store %arg4[%c0_10, %c1, %c0_11], %15 {strides = array<i32>} : memref<1x2x128xf32, #tpu.memory_space<vmem>>, vector<1x1x128xf32>,
    return
  }
  func.func @transform_0(%arg0: i32) -> (i32, i32) {
    %c0_i32 = arith.constant 0 : i32
    %c0_i32_0 = arith.constant 0 : i32
    return %arg0, %c0_i32 : i32, i32
  }
  func.func @transform_1(%arg0: i32) -> (i32, i32) {
    %c0_i32 = arith.constant 0 : i32
    %c0_i32_0 = arith.constant 0 : i32
    %c0_i32_1 = arith.constant 0 : i32
    return %c0_i32, %c0_i32_0 : i32, i32
  }
  func.func @transform_2(%arg0: i32) -> (i32, i32) {
    %c0_i32 = arith.constant 0 : i32
    %c0_i32_0 = arith.constant 0 : i32
    return %arg0, %c0_i32 : i32, i32
  }
  func.func @transform_3(%arg0: i32) -> (i32, i32, i32) {
    %c0_i32 = arith.constant 0 : i32
    %c0_i32_0 = arith.constant 0 : i32
    %c0_i32_1 = arith.constant 0 : i32
    return %arg0, %c0_i32, %c0_i32_0 : i32, i32, i32
  }
}

</mosaic_0001>

<llo_original>
// kernel: tpu_custom_call.1
$region0: #{tpu_custom_call.1}
  #allocation0 [shape = 'u32[]', space=smem, size = 0x4, offset = 0x4, fixed_abs, tag = 'smem constant byte address 0x4 - core index']
  #allocation1 [shape = 'u32[144,128]{1,0:T(1,128)}', space=vmem, size = 0x12000, scoped, tag = 'internal scratch']
  %s0 = inlined_call_operand.hbm [shape: f32[16,256], index: 0, kind: input, shape index: {}]
  %s1 = inlined_call_operand.hbm [shape: bf16[256,128], index: 1, kind: input, shape index: {}]
  %s2 = inlined_call_operand.hbm [shape: f32[16,128], index: 2, kind: output, shape index: {0}]
  %s3 = inlined_call_operand.hbm [shape: f32[2,2,128], index: 3, kind: output, shape index: {1}]
  %4 = xla_tuple %s2, %s3
  %s5 = sld [smem:[#allocation0]]
  $region57: #{tpu_custom_call.1} parent=0
    _
  %s7 = ssub.s32 1, %s5
  %s8 = scalar_select 0, %s7, %s5
  $region1: #{tpu_custom_call.1} parent=0
    #allocation2 [shape = 'u8[16384]{0}', space=vmem, size = 0x4000, scoped, tag = 'input window, operand 0']
    #allocation3 [shape = 's32[2]{0}', space=sflag, size = 0x8, scoped, tag = 'scoped memory for tpu_custom_call.1']
    #allocation4 [shape = 's32[2]{0}', space=sflag, size = 0x8, scoped, tag = 'scoped memory for tpu_custom_call.1']
    #allocation5 [shape = 'u8[65536]{0}', space=vmem, size = 0x10000, scoped, tag = 'input window, operand 1, single buffered']
    #allocation6 [shape = 's32[1]{0}', space=sflag, size = 0x4, scoped, tag = 'scoped memory for tpu_custom_call.1']
    #allocation7 [shape = 'u8[8192]{0}', space=vmem, size = 0x2000, scoped, tag = 'output window, operand 0']
    #allocation8 [shape = 'u8[2048]{0}', space=vmem, size = 0x800, scoped, tag = 'output window, operand 1']
    #allocation9 [shape = 's32[2]{0}', space=sflag, size = 0x8, scoped, tag = 'scoped memory for tpu_custom_call.1']
    %9 = vsyncpa [#allocation3], 0
    %s10 = scalar_lea.sflag [#allocation3], 1
    %11 = vsyncpa %s10, 0
    %12 = vsyncpa [#allocation6], 0
    %13 = vsyncpa [#allocation4], 0
    %s14 = scalar_lea.sflag [#allocation4], 1
    %15 = vsyncpa %s14, 0
    %16 = vsyncpa [#allocation9], 0
    %s17 = scalar_lea.sflag [#allocation9], 1
    %18 = vsyncpa %s17, 0
    loop: start=0, step=1, limit=4
    $region2: #{tpu_custom_call.1} parent=1 // loop_pre_header
      _
    $region3: #{tpu_custom_call.1} parent=1 // loop_header
      %s20 = sphi 0, %s24
      %p21 = scmp.ge.s32.totalorder %s20, 4
      %s30 = sphi 0, %s32
      %s33 = sphi 0, %s30
      %s34 = sphi 0, %s33
      %s50 = sphi 0, %s34
      %s54 = sphi 0, %s54
      %s56 = sphi 0, %s54
      %s57 = sphi 0, %s56
      %s71 = sphi 0, %s57
      %s77 = sphi 0, %s79
      %s80 = sphi 0, %s77
      %s81 = sphi 0, %s80
      %s97 = sphi 0, %s81
      %s103 = sphi 0, %s105
      %s106 = sphi 0, %s103
      %s107 = sphi 0, %s106
      %s123 = sphi 0, %s107
    $region4: #{tpu_custom_call.1} parent=1 // loop_header_branch
      %23 = sbr.rel (%p21) target = $region8
    $region5: #{tpu_custom_call.1} parent=1 // loop_body
      %s25 = ssub.s32 %s20, 1
      %s26 = ssub.s32 %s20, 2
      %s27 = sadd.s32 %s20, 1
      %s28 = ssub.s32 %s20, %s27
      %p29 = scmp.eq.s32.totalorder %s28, 0
      %s31 = sadd.s32 %s30, 1
      %s32 = scalar_select %p29, %s30, %s31
      %p35 = pneg %p29
      %p36 = scmp.eq.s32.totalorder %s20, 1
      %p37 = por %p35, %p36
      %p38 = scmp.ne.s32.totalorder %s30, %s33
      %p39 = scmp.eq.s32.totalorder %s20, 0
      %p40 = por %p38, %p39
      %p41 = scmp.ne.s32.totalorder %s30, %s33
      %p42 = scmp.eq.s32.totalorder %s25, 1
      %p43 = por %p41, %p42
      %p44 = scmp.ne.s32.totalorder %s33, %s34
      %p45 = scmp.eq.s32.totalorder %s25, 0
      %p46 = por %p44, %p45
      %p47 = scmp.ne.s32.totalorder %s33, %s34
      %p48 = scmp.eq.s32.totalorder %s26, 1
      %p49 = por %p47, %p48
      %p51 = scmp.ne.s32.totalorder %s34, %s50
      %p52 = scmp.eq.s32.totalorder %s26, 0
      %p53 = por %p51, %p52
      %s55 = sadd.s32 %s54, 1
      %p58 = scmp.eq.s32.totalorder %s20, 1
      %p59 = scmp.ne.s32.totalorder %s54, %s56
      %p60 = scmp.eq.s32.totalorder %s20, 0
      %p61 = por %p59, %p60
      %p62 = scmp.ne.s32.totalorder %s54, %s56
      %p63 = scmp.eq.s32.totalorder %s25, 1
      %p64 = por %p62, %p63
      %p65 = scmp.ne.s32.totalorder %s56, %s57
      %p66 = scmp.eq.s32.totalorder %s25, 0
      %p67 = por %p65, %p66
      %p68 = scmp.ne.s32.totalorder %s56, %s57
      %p69 = scmp.eq.s32.totalorder %s26, 1
      %p70 = por %p68, %p69
      %p72 = scmp.ne.s32.totalorder %s57, %s71
      %p73 = scmp.eq.s32.totalorder %s26, 0
      %p74 = por %p72, %p73
      %s75 = ssub.s32 %s20, %s27
      %p76 = scmp.eq.s32.totalorder %s75, 0
      %s78 = sadd.s32 %s77, 1
      %s79 = scalar_select %p76, %s77, %s78
      %p82 = pneg %p76
      %p83 = scmp.eq.s32.totalorder %s20, 1
      %p84 = por %p82, %p83
      %p85 = scmp.ne.s32.totalorder %s77, %s80
      %p86 = scmp.eq.s32.totalorder %s20, 0
      %p87 = por %p85, %p86
      %p88 = scmp.ne.s32.totalorder %s77, %s80
      %p89 = scmp.eq.s32.totalorder %s25, 1
      %p90 = por %p88, %p89
      %p91 = scmp.ne.s32.totalorder %s80, %s81
      %p92 = scmp.eq.s32.totalorder %s25, 0
      %p93 = por %p91, %p92
      %p94 = scmp.ne.s32.totalorder %s80, %s81
      %p95 = scmp.eq.s32.totalorder %s26, 1
      %p96 = por %p94, %p95
      %p98 = scmp.ne.s32.totalorder %s81, %s97
      %p99 = scmp.eq.s32.totalorder %s26, 0
      %p100 = por %p98, %p99
      %s101 = ssub.s32 %s20, %s27
      %p102 = scmp.eq.s32.totalorder %s101, 0
      %s104 = sadd.s32 %s103, 1
      %s105 = scalar_select %p102, %s103, %s104
      %p108 = pneg %p102
      %p109 = scmp.eq.s32.totalorder %s20, 1
      %p110 = por %p108, %p109
      %p111 = scmp.ne.s32.totalorder %s103, %s106
      %p112 = scmp.eq.s32.totalorder %s20, 0
      %p113 = por %p111, %p112
      %p114 = scmp.ne.s32.totalorder %s103, %s106
      %p115 = scmp.eq.s32.totalorder %s25, 1
      %p116 = por %p114, %p115
      %p117 = scmp.ne.s32.totalorder %s106, %s107
      %p118 = scmp.eq.s32.totalorder %s25, 0
      %p119 = por %p117, %p118
      %p120 = scmp.ne.s32.totalorder %s106, %s107
      %p121 = scmp.eq.s32.totalorder %s26, 1
      %p122 = por %p120, %p121
      %p124 = scmp.ne.s32.totalorder %s107, %s123
      %p125 = scmp.eq.s32.totalorder %s26, 0
      %p126 = por %p124, %p125
      %p127 = scmp.le.s32.totalorder 1, %s20
      %p128 = scmp.lt.s32.totalorder %s20, 3
      %p129 = pnand %p127, %p128
      %p130 = pneg %p129
      // Predicated region
      $region9: #{tpu_custom_call.1} parent=5 // pred_check
        _
      $region10: #{tpu_custom_call.1} parent=5 // pred_check_branch
        %132 = sbr.rel (%p129) target = $region12
      $region11: #{tpu_custom_call.1} parent=5 // pred_region
        %s133 = ssub.s32 %s20, 1
        // Predicated region
        $region13: #{tpu_custom_call.1} parent=11 // pred_check
          %p134 = pneg %p67
        $region14: #{tpu_custom_call.1} parent=11 // pred_check_branch
          %136 = sbr.rel (%p134) target = $region16
        $region15: #{tpu_custom_call.1} parent=11 // pred_region
          %s138 = ssub.s32 2048, 2048
          %139 = vsyncadd [#allocation6], %s138
          %s140 = sshll.u32 [#allocation5], 4
          %s141 = int_to_ptr.vmem [resolvable:$true] %s140
          %146 = dma.hbm_to_vmem [thread:$0]  %s1, 2048, %s141, [#allocation6], 64, 64, 4
        $region16: #{tpu_custom_call.1} parent=11 // pred_fallthru
          _
      $region12: #{tpu_custom_call.1} parent=5 // pred_fallthru
        _
      %p147 = scmp.lt.s32.totalorder %s20, 2
      // Predicated region
      $region17: #{tpu_custom_call.1} parent=5 // pred_check
        %p148 = pneg %p147
      $region18: #{tpu_custom_call.1} parent=5 // pred_check_branch
        %150 = sbr.rel (%p148) target = $region20
      $region19: #{tpu_custom_call.1} parent=5 // pred_region
        // Predicated region
        $region21: #{tpu_custom_call.1} parent=19 // pred_check
          %p151 = pneg %p40
        $region22: #{tpu_custom_call.1} parent=19 // pred_check_branch
          %153 = sbr.rel (%p151) target = $region24
        $region23: #{tpu_custom_call.1} parent=19 // pred_region
          %s154 = sand.u32 %s30, 1
          %s155 = scalar_lea.sflag [#allocation3], %s154
          %s156 = sand.u32 %s30, 1
          %s157 = smul.addr %s156, 16
          %s158 = scalar_lea.vmem [#allocation2], %s157
          %s160 = ssub.s32 256, 256
          %161 = vsyncadd %s155, %s160
          %s162 = smul.addr %s20, 2
          %s163 = smul.addr %s162, 128
          %s164 = scalar_lea.hbm %s0, %s163
          %s166 = sshll.u32 %s158, 4
          %s167 = int_to_ptr.vmem [resolvable:$true] %s166
          %169 = dma.hbm_to_vmem [thread:$0]  %s164, 256, %s167, %s155
        $region24: #{tpu_custom_call.1} parent=19 // pred_fallthru
          _
      $region20: #{tpu_custom_call.1} parent=5 // pred_fallthru
        _
      %p170 = scmp.le.s32.totalorder 1, %s20
      %p171 = scmp.lt.s32.totalorder %s20, 3
      %p172 = pnand %p170, %p171
      %p173 = pneg %p172
      // Predicated region
      $region25: #{tpu_custom_call.1} parent=5 // pred_check
        _
      $region26: #{tpu_custom_call.1} parent=5 // pred_check_branch
        %175 = sbr.rel (%p172) target = $region28
      $region27: #{tpu_custom_call.1} parent=5 // pred_region
        %s176 = ssub.s32 %s20, 1
        %s177 = sand.u32 %s33, 1
        %s178 = scalar_lea.sflag [#allocation3], %s177
        %s179 = sand.u32 %s33, 1
        %s180 = smul.addr %s179, 16
        %s181 = scalar_lea.vmem [#allocation2], %s180
        // Predicated region
        $region29: #{tpu_custom_call.1} parent=27 // pred_check
          %p182 = pneg %p46
        $region30: #{tpu_custom_call.1} parent=27 // pred_check_branch
          %184 = sbr.rel (%p182) target = $region32
        $region31: #{tpu_custom_call.1} parent=27 // pred_region
          %185 = dma.done %s178, 256
        $region32: #{tpu_custom_call.1} parent=27 // pred_fallthru
          _
        // Predicated region
        $region33: #{tpu_custom_call.1} parent=27 // pred_check
          %p186 = pneg %p67
        $region34: #{tpu_custom_call.1} parent=27 // pred_check_branch
          %188 = sbr.rel (%p186) target = $region36
        $region35: #{tpu_custom_call.1} parent=27 // pred_region
          %189 = dma.done [#allocation6], 2048
        $region36: #{tpu_custom_call.1} parent=27 // pred_fallthru
          _
        %s190 = sand.u32 %s33, 1
        %s191 = scalar_lea.sflag [#allocation3], %s190
        %s192 = sand.u32 %s33, 1
        %s193 = smul.addr %s192, 16
        %s194 = scalar_lea.vmem [#allocation2], %s193
        %p195 = pneg %p46
        %p196 = pneg %p43
        %p197 = pneg %p67
        %p198 = pneg %p64
        %p199 = pneg %p93
        %p200 = pneg %p90
        %s201 = sand.u32 %s80, 1
        %s202 = scalar_lea.sflag [#allocation4], %s201
        %s203 = sand.u32 %s80, 1
        %s204 = smul.addr %s203, 8
        %s205 = scalar_lea.vmem [#allocation7], %s204
        %p206 = pneg %p119
        %p207 = pneg %p116
        %s208 = sand.u32 %s106, 1
        %s209 = scalar_lea.sflag [#allocation9], %s208
        %s210 = sand.u32 %s106, 1
        %s211 = smul.addr %s210, 2
        %s212 = scalar_lea.vmem [#allocation8], %s211
        %v214 = vld [vmem:[%s181] sm:$0xff]
        %v215 = vld [vmem:[%s181 + $0x8] sm:$0xff]
        %v216 = vpack.c.bf16 %v214, %v214
        %v217 = vpack.c.bf16 %v215, %v215
        %v218 = vld [vmem:[#allocation5] sm:$0xf]
        %v219 = vld [vmem:[#allocation5 + $0x4] sm:$0xf]
        %v220 = vld [vmem:[#allocation5 + $0x8] sm:$0xf]
        %v221 = vld [vmem:[#allocation5 + $0xc] sm:$0xf]
        %v222 = vld [vmem:[#allocation5 + $0x10] sm:$0xf]
        %v223 = vld [vmem:[#allocation5 + $0x14] sm:$0xf]
        %v224 = vld [vmem:[#allocation5 + $0x18] sm:$0xf]
        %v225 = vld [vmem:[#allocation5 + $0x1c] sm:$0xf]
        %v226 = vld [vmem:[#allocation5 + $0x20] sm:$0xf]
        %v227 = vld [vmem:[#allocation5 + $0x24] sm:$0xf]
        %v228 = vld [vmem:[#allocation5 + $0x28] sm:$0xf]
        %v229 = vld [vmem:[#allocation5 + $0x2c] sm:$0xf]
        %v230 = vld [vmem:[#allocation5 + $0x30] sm:$0xf]
        %v231 = vld [vmem:[#allocation5 + $0x34] sm:$0xf]
        %v232 = vld [vmem:[#allocation5 + $0x38] sm:$0xf]
        %v233 = vld [vmem:[#allocation5 + $0x3c] sm:$0xf]
        %v234 = vld [vmem:[#allocation5 + $0x40] sm:$0xf]
        %v235 = vld [vmem:[#allocation5 + $0x44] sm:$0xf]
        %v236 = vld [vmem:[#allocation5 + $0x48] sm:$0xf]
        %v237 = vld [vmem:[#allocation5 + $0x4c] sm:$0xf]
        %v238 = vld [vmem:[#allocation5 + $0x50] sm:$0xf]
        %v239 = vld [vmem:[#allocation5 + $0x54] sm:$0xf]
        %v240 = vld [vmem:[#allocation5 + $0x58] sm:$0xf]
        %v241 = vld [vmem:[#allocation5 + $0x5c] sm:$0xf]
        %v242 = vld [vmem:[#allocation5 + $0x60] sm:$0xf]
        %v243 = vld [vmem:[#allocation5 + $0x64] sm:$0xf]
        %v244 = vld [vmem:[#allocation5 + $0x68] sm:$0xf]
        %v245 = vld [vmem:[#allocation5 + $0x6c] sm:$0xf]
        %v246 = vld [vmem:[#allocation5 + $0x70] sm:$0xf]
        %v247 = vld [vmem:[#allocation5 + $0x74] sm:$0xf]
        %v248 = vld [vmem:[#allocation5 + $0x78] sm:$0xf]
        %v249 = vld [vmem:[#allocation5 + $0x7c] sm:$0xf]
        %v282 = vunpack.c.l.b16 %v218
        %v283 = vunpack.c.l.b16 %v219
        %v284 = vunpack.c.l.b16 %v220
        %v285 = vunpack.c.l.b16 %v221
        %v286 = vunpack.c.l.b16 %v222
        %v287 = vunpack.c.l.b16 %v223
        %v288 = vunpack.c.l.b16 %v224
        %v289 = vunpack.c.l.b16 %v225
        %v290 = vunpack.c.l.b16 %v226
        %v291 = vunpack.c.l.b16 %v227
        %v292 = vunpack.c.l.b16 %v228
        %v293 = vunpack.c.l.b16 %v229
        %v294 = vunpack.c.l.b16 %v230
        %v295 = vunpack.c.l.b16 %v231
        %v296 = vunpack.c.l.b16 %v232
        %v297 = vunpack.c.l.b16 %v233
        %v298 = vunpack.c.l.b16 %v234
        %v299 = vunpack.c.l.b16 %v235
        %v300 = vunpack.c.l.b16 %v236
        %v301 = vunpack.c.l.b16 %v237
        %v302 = vunpack.c.l.b16 %v238
        %v303 = vunpack.c.l.b16 %v239
        %v304 = vunpack.c.l.b16 %v240
        %v305 = vunpack.c.l.b16 %v241
        %v306 = vunpack.c.l.b16 %v242
        %v307 = vunpack.c.l.b16 %v243
        %v308 = vunpack.c.l.b16 %v244
        %v309 = vunpack.c.l.b16 %v245
        %v310 = vunpack.c.l.b16 %v246
        %v311 = vunpack.c.l.b16 %v247
        %v312 = vunpack.c.l.b16 %v248
        %v313 = vunpack.c.l.b16 %v249
        %v314 = vpack.c.b16 %v283, %v282
        %v315 = vpack.c.b16 %v285, %v284
        %v316 = vpack.c.b16 %v287, %v286
        %v317 = vpack.c.b16 %v289, %v288
        %v318 = vpack.c.b16 %v291, %v290
        %v319 = vpack.c.b16 %v293, %v292
        %v320 = vpack.c.b16 %v295, %v294
        %v321 = vpack.c.b16 %v297, %v296
        %v322 = vpack.c.b16 %v299, %v298
        %v323 = vpack.c.b16 %v301, %v300
        %v324 = vpack.c.b16 %v303, %v302
        %v325 = vpack.c.b16 %v305, %v304
        %v326 = vpack.c.b16 %v307, %v306
        %v327 = vpack.c.b16 %v309, %v308
        %v328 = vpack.c.b16 %v311, %v310
        %v329 = vpack.c.b16 %v313, %v312
        %346 = vmatprep.subr.bf16.mxu0 0
        %347 = vmatpush1.bf16.msra.mxu0 %v314
        %348 = vmatprep.subr.bf16.mxu0 0
        %349 = vmatpush1.bf16.msra.mxu0 %v315
        %350 = vmatprep.subr.bf16.mxu0 0
        %351 = vmatpush1.bf16.msra.mxu0 %v316
        %352 = vmatprep.subr.bf16.mxu0 0
        %353 = vmatpush1.bf16.msra.mxu0 %v317
        %354 = vmatprep.subr.bf16.mxu0 0
        %355 = vmatpush1.bf16.msra.mxu0 %v318
        %356 = vmatprep.subr.bf16.mxu0 0
        %357 = vmatpush1.bf16.msra.mxu0 %v319
        %358 = vmatprep.subr.bf16.mxu0 0
        %359 = vmatpush1.bf16.msra.mxu0 %v320
        %360 = vmatprep.subr.bf16.mxu0 0
        %361 = vmatpush1.bf16.msra.mxu0 %v321
        %362 = vmatprep.subr.bf16.mxu0 0
        %363 = vmatpush1.bf16.msra.mxu0 %v322
        %364 = vmatprep.subr.bf16.mxu0 0
        %365 = vmatpush1.bf16.msra.mxu0 %v323
        %366 = vmatprep.subr.bf16.mxu0 0
        %367 = vmatpush1.bf16.msra.mxu0 %v324
        %368 = vmatprep.subr.bf16.mxu0 0
        %369 = vmatpush1.bf16.msra.mxu0 %v325
        %370 = vmatprep.subr.bf16.mxu0 0
        %371 = vmatpush1.bf16.msra.mxu0 %v326
        %372 = vmatprep.subr.bf16.mxu0 0
        %373 = vmatpush1.bf16.msra.mxu0 %v327
        %374 = vmatprep.subr.bf16.mxu0 0
        %375 = vmatpush1.bf16.msra.mxu0 %v328
        %376 = vmatprep.subr.bf16.mxu0 0
        %377 = vmatpush1.bf16.msra.mxu0 %v329
        %378 = vmatprep.mubr.bf16.mxu0 %v217
        %379 = vmatmul.mubr.bf16.gmra.mrb[0].mxu0 %v216
        %v380 = vpop.f32.mrb[0].mxu0
        %v381 = vadd.f32 0.0, %v380
        %v382 = vpop.f32.mrb[0].mxu0
        %v383 = vpop.f32.mrb[0].mxu0
        %v384 = vpop.f32.mrb[0].mxu0
        %385 = vdwg.mxu0
        %386 = vst [vmem:[%s205] sm:$0xff] %v381
        %v387 = vrot.slane %v381, 4
        %v388 = vadd.f32 %v381, %v387
        %v389 = vrot.slane %v388, 2
        %v390 = vadd.f32 %v388, %v389
        %v391 = vrot.slane %v390, 1
        %v392 = vadd.f32 %v390, %v391
        %393 = vst [vmem:[%s212] sm:$0x1] %v392
        %v394 = vmul.f32 %v381, %v381
        %v395 = vrot.slane %v394, 4
        %v396 = vadd.f32 %v394, %v395
        %v397 = vrot.slane %v396, 2
        %v398 = vadd.f32 %v396, %v397
        %v399 = vrot.slane %v398, 1
        %v400 = vadd.f32 %v398, %v399
        %401 = vst [vmem:[%s212 + $0x1] sm:$0x1] %v400
        %s402 = sand.u32 %s80, 1
        %s403 = scalar_lea.sflag [#allocation4], %s402
        %s404 = sand.u32 %s80, 1
        %s405 = smul.addr %s404, 8
        %s406 = scalar_lea.vmem [#allocation7], %s405
        %s407 = sand.u32 %s106, 1
        %s408 = scalar_lea.sflag [#allocation9], %s407
        %s409 = sand.u32 %s106, 1
        %s410 = smul.addr %s409, 2
        %s411 = scalar_lea.vmem [#allocation8], %s410
        // Predicated region
        $region37: #{tpu_custom_call.1} parent=27 // pred_check
          %p412 = pneg %p90
        $region38: #{tpu_custom_call.1} parent=27 // pred_check_branch
          %414 = sbr.rel (%p412) target = $region40
        $region39: #{tpu_custom_call.1} parent=27 // pred_region
          %s416 = ssub.s32 128, 128
          %417 = vsyncadd %s403, %s416
          %s418 = smul.addr %s25, 128
          %s419 = scalar_lea.hbm %s2, %s418
          %s421 = sshll.u32 %s406, 4
          %s422 = int_to_ptr.vmem [resolvable:$true] %s421
          %424 = dma.vmem_to_hbm [thread:$0]  %s422, 128, %s419, %s403
        $region40: #{tpu_custom_call.1} parent=27 // pred_fallthru
          _
        // Predicated region
        $region41: #{tpu_custom_call.1} parent=27 // pred_check
          %p425 = pneg %p116
        $region42: #{tpu_custom_call.1} parent=27 // pred_check_branch
          %427 = sbr.rel (%p425) target = $region44
        $region43: #{tpu_custom_call.1} parent=27 // pred_region
          %s429 = ssub.s32 32, 32
          %430 = vsyncadd %s408, %s429
          %s431 = smul.addr %s25, 32
          %s432 = scalar_lea.hbm %s3, %s431
          %s434 = sshll.u32 %s411, 4
          %s435 = int_to_ptr.vmem [resolvable:$true] %s434
          %437 = dma.vmem_to_hbm [thread:$0]  %s435, 32, %s432, %s408
        $region44: #{tpu_custom_call.1} parent=27 // pred_fallthru
          _
      $region28: #{tpu_custom_call.1} parent=5 // pred_fallthru
        _
      %p438 = scmp.le.s32.totalorder 2, %s20
      // Predicated region
      $region45: #{tpu_custom_call.1} parent=5 // pred_check
        %p439 = pneg %p438
      $region46: #{tpu_custom_call.1} parent=5 // pred_check_branch
        %441 = sbr.rel (%p439) target = $region48
      $region47: #{tpu_custom_call.1} parent=5 // pred_region
        %s442 = ssub.s32 %s20, 2
        // Predicated region
        $region49: #{tpu_custom_call.1} parent=47 // pred_check
          %p443 = pneg %p96
        $region50: #{tpu_custom_call.1} parent=47 // pred_check_branch
          %445 = sbr.rel (%p443) target = $region52
        $region51: #{tpu_custom_call.1} parent=47 // pred_region
          %s446 = sand.u32 %s81, 1
          %s447 = scalar_lea.sflag [#allocation4], %s446
          %s448 = sand.u32 %s81, 1
          %s449 = smul.addr %s448, 8
          %s450 = scalar_lea.vmem [#allocation7], %s449
          %451 = dma.done %s447, 128
        $region52: #{tpu_custom_call.1} parent=47 // pred_fallthru
          _
        // Predicated region
        $region53: #{tpu_custom_call.1} parent=47 // pred_check
          %p452 = pneg %p122
        $region54: #{tpu_custom_call.1} parent=47 // pred_check_branch
          %454 = sbr.rel (%p452) target = $region56
        $region55: #{tpu_custom_call.1} parent=47 // pred_region
          %s455 = sand.u32 %s107, 1
          %s456 = scalar_lea.sflag [#allocation9], %s455
          %s457 = sand.u32 %s107, 1
          %s458 = smul.addr %s457, 2
          %s459 = scalar_lea.vmem [#allocation8], %s458
          %460 = dma.done %s456, 32
        $region56: #{tpu_custom_call.1} parent=47 // pred_fallthru
          _
      $region48: #{tpu_custom_call.1} parent=5 // pred_fallthru
        _
    $region6: #{tpu_custom_call.1} parent=1 // loop_footer
      %s24 = sadd.s32 1, %s20
    $region7: #{tpu_custom_call.1} parent=1 // loop_footer_branch
      %19 = sbr.rel target = $region3
    $region8: #{tpu_custom_call.1} parent=1 // loop_exit
      _
    %461 = vsyncpa [#allocation3], 1
    %s462 = scalar_lea.sflag [#allocation3], 1
    %463 = vsyncpa %s462, 1
    %464 = vsyncpa [#allocation6], 1
    %465 = vsyncpa [#allocation4], 1
    %s466 = scalar_lea.sflag [#allocation4], 1
    %467 = vsyncpa %s466, 1
    %468 = vsyncpa [#allocation9], 1
    %s469 = scalar_lea.sflag [#allocation9], 1
    %470 = vsyncpa %s469, 1

</llo_original>
